<compile_context>
chip_gen: v7x
topology: tpu7x:2x2x1
jax: 0.10.0
libtpu: 0.0.40
codegen_flags: <defaults>
</compile_context>

<pallas_src>
import functools

import jax
import jax.numpy as jnp
from jax.experimental import pallas as pl
from jax.experimental.pallas import tpu as pltpu


# ----------------------------------------------------------------------------
# Pallas kernel 1: fused pointwise (1x1) convolutions == M-tiled flat matmul
# ----------------------------------------------------------------------------
def _matmul_kernel(a_ref, b_ref, o_ref):
    o_ref[...] = jnp.dot(
        a_ref[...], b_ref[...], preferred_element_type=jnp.float32
    ).astype(o_ref.dtype)


def pallas_matmul(a, b, *, out_dtype=jnp.float32, tile_m=512):
    """a: (M, K) @ b: (K, N) -> (M, N); M is tiled & pipelined, K/N stay whole."""
    M, Kd = a.shape
    K2, N = b.shape
    assert Kd == K2
    tm = M if M <= tile_m else tile_m      # full dim if small, else 8-aligned tile
    grid_m = pl.cdiv(M, tm)
    return pl.pallas_call(
        _matmul_kernel,
        grid=(grid_m,),
        in_specs=[
            pl.BlockSpec((tm, Kd), lambda i: (i, 0)),
            pl.BlockSpec((Kd, N), lambda i: (0, 0)),   # weights stay resident
        ],
        out_specs=pl.BlockSpec((tm, N), lambda i: (i, 0)),
        out_shape=jax.ShapeDtypeStruct((M, N), out_dtype),
        compiler_params=pltpu.CompilerParams(
            dimension_semantics=("parallel",),
            vmem_limit_bytes=32 * 1024 * 1024,
        ),
    )(a, b)


# ----------------------------------------------------------------------------
# Pallas kernel 2: haloed row-band DMA + mixture weighting + streaming window softmax
# ----------------------------------------------------------------------------
def _attention_stem_kernel(emb_ref, q_ref, kv_ref, o_ref, kvbuf, sem, *,
                           W, C, K, m, stride, tH, rows_halo):
    # emb_ref : (m*K*K,) f32 in SMEM  -- softmax-over-m mixture weights
    # q_ref   : (1, tH, W, C)         -- query row band (blocked, pipelined)
    # kv_ref  : (B, Hp, Wp, (m+2)*C)  -- raw HBM ref (channels = [q|k|v_0..v_{m-1}])
    # o_ref   : (1, tH, W, C)
    # kvbuf   : VMEM (2, rows_halo, Wp, (m+2)*C) double buffer
    # sem     : DMA semaphores (2,)
    b = pl.program_id(0)
    h = pl.program_id(1)
    f32 = jnp.float32

    def band_copy(hh, slot):
        row = hh * (tH * stride)
        return pltpu.make_async_copy(
            kv_ref.at[b, pl.ds(row, rows_halo)], kvbuf.at[slot], sem.at[slot])

    # Prime the double buffer on the first row band of each batch element.
    @pl.when(h == 0)
    def _():
        band_copy(0, 0).start()

    # Prefetch the next row band while we compute on the current one.
    @pl.when(h + 1 < pl.num_programs(1))
    def _():
        band_copy(h + 1, (h + 1) % 2).start()

    q = q_ref[0].astype(f32)                 # (tH, W, C) -- pipelined load

    cur = h % 2
    band_copy(h, cur).wait()

    def window(c0, kh, kw):
        # window element (i, j) -> kv[b, i*stride + kh (band-local), j*stride + kw, c0:c0+C]
        if stride == 1:
            blk = kvbuf[cur, kh:kh + tH, kw:kw + W, c0:c0 + C]
        else:
            # TODO(synk): pre-stride at DMA time instead of strided VMEM reads.
            blk = kvbuf[cur,
                        pl.ds(kh, tH, stride=stride),
                        pl.ds(kw, W, stride=stride),
                        pl.ds(c0, C)]
        return blk.astype(f32)

    # ---- pass 1: running max of q*k over the K*K window positions ----------
    s_max = q * window(C, 0, 0)
    for kh in range(K):
        for kw in range(K):
            if kh == 0 and kw == 0:
                continue
            s_max = jnp.maximum(s_max, q * window(C, kh, kw))

    # ---- pass 2: streaming softmax numerator / denominator -----------------
    denom = jnp.zeros((tH, W, C), f32)
    acc = jnp.zeros((tH, W, C), f32)
    for kh in range(K):
        for kw in range(K):
            p = jnp.exp(q * window(C, kh, kw) - s_max)
            vmix = emb_ref[kh * K + kw] * window(2 * C, kh, kw)          # m = 0
            for mm in range(1, m):
                vmix = vmix + emb_ref[mm * K * K + kh * K + kw] * window((2 + mm) * C, kh, kw)
            denom = denom + p
            acc = acc + p * vmix

    o_ref[0] = (acc * pl.reciprocal(denom)).astype(o_ref.dtype)


def _pick_tile_h(H, stride, K, Wp, KC, itemsize, budget=3 * 1024 * 1024):
    """Largest divisor of H whose haloed k/v band fits the per-buffer budget."""
    best = 1
    for t in range(1, H + 1):
        if H % t != 0:
            continue
        rows = (t - 1) * stride + K
        if rows * Wp * KC * itemsize <= budget:
            best = t
    return best


# ----------------------------------------------------------------------------
# Forward wrapper (glue: layout transposes, padding, parameter packing)
# ----------------------------------------------------------------------------
def attention_stem_forward(x, params, *, kernel_size, stride=1, padding=0,
                           groups=1, m=4, tile_h=None, kv_dtype=jnp.float32):
    # x: (B, C_in, H, W) NCHW, as in PyTorch.
    B, C_in, H, W = x.shape
    C = params["w_query"].shape[0]
    K = kernel_size
    assert C % groups == 0  # groups only reshape channels in PyTorch -> no-op on values

    x_nhwc = jnp.transpose(x, (0, 2, 3, 1)).astype(jnp.float32)           # (B, H, W, Cin)
    px = jnp.pad(x_nhwc, ((0, 0), (padding, padding), (padding, padding), (0, 0)))
    Hp, Wp = H + 2 * padding, W + 2 * padding
    # PyTorch truncates the unfolded windows to [:H, :W]; they must exist:
    assert (H - 1) * stride + K <= Hp and (W - 1) * stride + K <= Wp

    # --- fused 1x1 convs: channels [q | k | v_0..v_{m-1}], one pass over padded x ---
    w_all = jnp.concatenate(
        [params["w_query"][None], params["w_key"][None], params["w_value"]], axis=0
    )                                                                      # (m+2, C, Cin)
    KC = (m + 2) * C
    w_big = jnp.transpose(w_all, (2, 0, 1)).reshape(C_in, KC)              # (Cin, (m+2)*C)
    kv = pallas_matmul(px.reshape(B * Hp * Wp, C_in), w_big, out_dtype=kv_dtype)
    kv = kv.reshape(B, Hp, Wp, KC)                                         # natural layout, no transpose
    # queries are channels [0, C) of the interior (unpadded) region
    q = kv[:, padding:padding + H, padding:padding + W, :C]

    # mixture embedding softmax over m (tiny parameter-side computation; glue)
    emb_a = params["emb_mix"] @ params["emb_a"]                            # (m, K)
    emb_b = params["emb_mix"] @ params["emb_b"]                            # (m, K)
    emb = emb_a[:, :, None] + emb_b[:, None, :]                            # (m, K, K)
    emb = jax.nn.softmax(emb.reshape(m, K * K), axis=0).reshape(-1)        # idx = mm*K*K + kh*K + kw
    emb = emb.astype(jnp.float32)

    # --- spatial row-band tiling ---
    itemsize = jnp.dtype(kv_dtype).itemsize
    if tile_h is None:
        tile_h = _pick_tile_h(H, stride, K, Wp, KC, itemsize)
    assert H % tile_h == 0
    nH = H // tile_h
    rows_halo = (tile_h - 1) * stride + K

    kernel = functools.partial(
        _attention_stem_kernel,
        W=W, C=C, K=K, m=m, stride=stride, tH=tile_h, rows_halo=rows_halo)

    out_nhwc = pl.pallas_call(
        kernel,
        grid=(B, nH),
        in_specs=[
            pl.BlockSpec(memory_space=pltpu.MemorySpace.SMEM),              # emb scalars
            pl.BlockSpec((1, tile_h, W, C), lambda b, h: (b, h, 0, 0)),     # q row band
            pl.BlockSpec(memory_space=pl.ANY),                              # kv stays in HBM
        ],
        out_specs=pl.BlockSpec((1, tile_h, W, C), lambda b, h: (b, h, 0, 0)),
        out_shape=jax.ShapeDtypeStruct((B, H, W, C), jnp.float32),
        scratch_shapes=[
            pltpu.VMEM((2, rows_halo, Wp, KC), kv_dtype),                   # haloed k/v double buffer
            pltpu.SemaphoreType.DMA((2,)),
        ],
        compiler_params=pltpu.CompilerParams(
            # batch axis may be split across TensorCores; the row-band axis must stay
            # sequential per batch so the h==0 DMA priming is correct.
            dimension_semantics=("parallel", "arbitrary"),
            vmem_limit_bytes=32 * 1024 * 1024,
        ),
    )(emb, q, kv)

    return jnp.transpose(out_nhwc, (0, 3, 1, 2))                            # (B, C, H, W)


# ----------------------------------------------------------------------------
# Deterministic parameter init (shapes from AttentionStem.__init__)
# ----------------------------------------------------------------------------
def init_params(key, in_channels, out_channels, kernel_size, groups, m):
    ks = jax.random.split(key, 6)
    std = (2.0 / out_channels) ** 0.5  # kaiming_normal fan_out for 1x1 conv
    return dict(
        w_query=std * jax.random.normal(ks[0], (out_channels, in_channels), jnp.float32),
        w_key=std * jax.random.normal(ks[1], (out_channels, in_channels), jnp.float32),
        w_value=std * jax.random.normal(ks[2], (m, out_channels, in_channels), jnp.float32),
        emb_a=jax.random.normal(ks[3], (out_channels // groups, kernel_size), jnp.float32),
        emb_b=jax.random.normal(ks[4], (out_channels // groups, kernel_size), jnp.float32),
        emb_mix=jax.random.normal(ks[5], (m, out_channels // groups), jnp.float32),
    )


# ----------------------------------------------------------------------------
# Pure-JAX reference (mirrors the PyTorch forward) for correctness check
# ----------------------------------------------------------------------------
def reference_forward(x, params, *, kernel_size, stride=1, padding=0, groups=1, m=4):
    B, C_in, H, W = x.shape
    C_out = params["w_query"].shape[0]
    K = kernel_size
    px = jnp.pad(x, ((0, 0), (0, 0), (padding, padding), (padding, padding)))
    q = jnp.einsum("oc,bchw->bohw", params["w_query"], x)
    k = jnp.einsum("oc,bchw->bohw", params["w_key"], px)
    v = jnp.einsum("moc,bchw->mbohw", params["w_value"], px)

    def windows(arr):  # (..., Hp, Wp) -> (..., H, W, K, K)  (unfold along H then W)
        rows = []
        for kh in range(K):
            cols = []
            for kw in range(K):
                cols.append(arr[..., kh:kh + (H - 1) * stride + 1:stride,
                                kw:kw + (W - 1) * stride + 1:stride])
            rows.append(jnp.stack(cols, axis=-1))
        return jnp.stack(rows, axis=-2)

    k_w = windows(k)                                   # (B, C, H, W, K, K)
    v_w = windows(v)                                   # (m, B, C, H, W, K, K)
    emb_a = params["emb_mix"] @ params["emb_a"]
    emb_b = params["emb_mix"] @ params["emb_b"]
    emb = emb_a[:, :, None] + emb_b[:, None, :]
    emb = jax.nn.softmax(emb.reshape(m, -1), axis=0).reshape(m, 1, 1, 1, 1, K, K)
    v_w = (emb * v_w).sum(axis=0).reshape(B, C_out, H, W, K * K)
    k_w = k_w.reshape(B, C_out, H, W, K * K)
    attn = jax.nn.softmax(q[..., None] * k_w, axis=-1)
    return (attn * v_w).sum(-1)                        # (B, C_out, H, W)


if __name__ == "__main__":
    B, C_in, H, W = 2, 4, 16, 16
    C_out, K, stride, padding, groups, m = 16, 3, 1, 1, 4, 4

    key = jax.random.PRNGKey(0)
    pkey, xkey = jax.random.split(key)
    params = init_params(pkey, C_in, C_out, K, groups, m)
    x = jax.random.normal(xkey, (B, C_in, H, W), jnp.float32)

    ref = reference_forward(
        x, params, kernel_size=K, stride=stride, padding=padding, groups=groups, m=m
    )

    # tile_h=8 exercises the multi-band double-buffered DMA path; None uses auto-tiling.
    for th in (8, None):
        out = attention_stem_forward(
            x, params, kernel_size=K, stride=stride, padding=padding,
            groups=groups, m=m, tile_h=th,
        )
        out = jax.block_until_ready(out)
        assert out.shape == (B, C_out, H, W)
        err = float(jnp.max(jnp.abs(out - ref)))
        assert jnp.allclose(out, ref, atol=1e-4, rtol=1e-4), err

    print("KERNEL_OK")
</pallas_src>

<mosaic_0001>
module attributes {stable_mosaic.version = 11 : i64} {
  func.func @_matmul_kernel(%arg0: i32, %arg1: memref<512x4xf32, #tpu.memory_space<vmem>>, %arg2: memref<4x96xf32, #tpu.memory_space<vmem>>, %arg3: memref<512x96xf32, #tpu.memory_space<vmem>>) attributes {dimension_semantics = [#tpu.dimension_semantics<parallel>], iteration_bounds = array<i64: 2>, scalar_prefetch = 0 : i64, scratch_operands = 0 : i64, tpu.core_type = #tpu.core_type<tc>, window_params = [{transform_indices = @transform_0, window_bounds = array<i64: 512, 4>}, {pipeline_mode = #tpu.pipeline_mode<synchronous>, transform_indices = @transform_1, window_bounds = array<i64: 4, 96>}, {transform_indices = @transform_2, window_bounds = array<i64: 512, 96>}]} {
    %c0 = arith.constant 0 : index
    %c0_0 = arith.constant 0 : index
    %0 = vector.load %arg1[%c0, %c0_0] : memref<512x4xf32, #tpu.memory_space<vmem>>, vector<512x4xf32>
    %c0_1 = arith.constant 0 : index
    %c0_2 = arith.constant 0 : index
    %1 = vector.load %arg2[%c0_1, %c0_2] : memref<4x96xf32, #tpu.memory_space<vmem>>, vector<4x96xf32>
    %cst = arith.constant dense<0.000000e+00> : vector<512x96xf32>
    %2 = tpu.matmul %0, %1, %cst {dimension_numbers = #tpu.dot_dimension_numbers<[1], [0], [0], [1], [0, 0, 1, 1], [], []>} : vector<512x4xf32>, vector<4x96xf32>, vector<512x96xf32> -> vector<512x96xf32>
    %c0_3 = arith.constant 0 : index
    %c0_4 = arith.constant 0 : index
    %3 = vector.load %arg3[%c0_3, %c0_4] : memref<512x96xf32, #tpu.memory_space<vmem>>, vector<512x96xf32>
    tpu.vector_store %arg3[%c0_3, %c0_4], %2 {strides = array<i32>} : memref<512x96xf32, #tpu.memory_space<vmem>>, vector<512x96xf32>,
    return
  }
  func.func @transform_0(%arg0: i32) -> (i32, i32) {
    %c0_i32 = arith.constant 0 : i32
    %c0_i32_0 = arith.constant 0 : i32
    return %arg0, %c0_i32 : i32, i32
  }
  func.func @transform_1(%arg0: i32) -> (i32, i32) {
    %c0_i32 = arith.constant 0 : i32
    %c0_i32_0 = arith.constant 0 : i32
    %c0_i32_1 = arith.constant 0 : i32
    return %c0_i32, %c0_i32_0 : i32, i32
  }
  func.func @transform_2(%arg0: i32) -> (i32, i32) {
    %c0_i32 = arith.constant 0 : i32
    %c0_i32_0 = arith.constant 0 : i32
    return %arg0, %c0_i32 : i32, i32
  }
}

</mosaic_0001>

<llo_original>
// kernel: tpu_custom_call.1
$region0: #{tpu_custom_call.1}
  #allocation0 [shape = 'u32[]', space=smem, size = 0x4, offset = 0x4, fixed_abs, tag = 'smem constant byte address 0x4 - core index']
  #allocation1 [shape = 'u32[144,128]{1,0:T(1,128)}', space=vmem, size = 0x12000, scoped, tag = 'internal scratch']
  %s0 = inlined_call_operand.vmem [shape: f32[648,4], index: 0, kind: input, shape index: {}]
  %s1 = inlined_call_operand.vmem [shape: f32[4,96], index: 1, kind: input, shape index: {}]
  %s2 = inlined_call_operand.vmem [shape: f32[648,96], index: 2, kind: output, shape index: {}]
  %s3 = sld [smem:[#allocation0]]
  $region89: #{tpu_custom_call.1} parent=0
    _
  %s5 = ssub.s32 1, %s3
  %s6 = scalar_select 0, %s5, %s3
  $region1: #{tpu_custom_call.1} parent=0
    #allocation2 [shape = 'u8[524288]{0}', space=vmem, size = 0x80000, scoped, tag = 'output window, operand 0']
    loop: start=0, step=1, limit=4
    $region2: #{tpu_custom_call.1} parent=1 // loop_pre_header
      _
    $region3: #{tpu_custom_call.1} parent=1 // loop_header
      %s8 = sphi 0, %s12
      %p9 = scmp.ge.s32.totalorder %s8, 4
      %s18 = sphi 0, %s20
      %s21 = sphi 0, %s18
      %s22 = sphi 0, %s21
      %s38 = sphi 0, %s22
      %s42 = sphi 0, %s42
      %s44 = sphi 0, %s42
      %s45 = sphi 0, %s44
      %s59 = sphi 0, %s45
      %s65 = sphi 0, %s67
      %s68 = sphi 0, %s65
      %s69 = sphi 0, %s68
      %s85 = sphi 0, %s69
    $region4: #{tpu_custom_call.1} parent=1 // loop_header_branch
      %11 = sbr.rel (%p9) target = $region8
    $region5: #{tpu_custom_call.1} parent=1 // loop_body
      %s13 = ssub.s32 %s8, 1
      %s14 = ssub.s32 %s8, 2
      %s15 = sadd.s32 %s8, 1
      %s16 = ssub.s32 %s8, %s15
      %p17 = scmp.eq.s32.totalorder %s16, 0
      %s19 = sadd.s32 %s18, 1
      %s20 = scalar_select %p17, %s18, %s19
      %p23 = pneg %p17
      %p24 = scmp.eq.s32.totalorder %s8, 1
      %p25 = por %p23, %p24
      %p26 = scmp.ne.s32.totalorder %s18, %s21
      %p27 = scmp.eq.s32.totalorder %s8, 0
      %p28 = por %p26, %p27
      %p29 = scmp.ne.s32.totalorder %s18, %s21
      %p30 = scmp.eq.s32.totalorder %s13, 1
      %p31 = por %p29, %p30
      %p32 = scmp.ne.s32.totalorder %s21, %s22
      %p33 = scmp.eq.s32.totalorder %s13, 0
      %p34 = por %p32, %p33
      %p35 = scmp.ne.s32.totalorder %s21, %s22
      %p36 = scmp.eq.s32.totalorder %s14, 1
      %p37 = por %p35, %p36
      %p39 = scmp.ne.s32.totalorder %s22, %s38
      %p40 = scmp.eq.s32.totalorder %s14, 0
      %p41 = por %p39, %p40
      %s43 = sadd.s32 %s42, 1
      %p46 = scmp.eq.s32.totalorder %s8, 1
      %p47 = scmp.ne.s32.totalorder %s42, %s44
      %p48 = scmp.eq.s32.totalorder %s8, 0
      %p49 = por %p47, %p48
      %p50 = scmp.ne.s32.totalorder %s42, %s44
      %p51 = scmp.eq.s32.totalorder %s13, 1
      %p52 = por %p50, %p51
      %p53 = scmp.ne.s32.totalorder %s44, %s45
      %p54 = scmp.eq.s32.totalorder %s13, 0
      %p55 = por %p53, %p54
      %p56 = scmp.ne.s32.totalorder %s44, %s45
      %p57 = scmp.eq.s32.totalorder %s14, 1
      %p58 = por %p56, %p57
      %p60 = scmp.ne.s32.totalorder %s45, %s59
      %p61 = scmp.eq.s32.totalorder %s14, 0
      %p62 = por %p60, %p61
      %s63 = ssub.s32 %s8, %s15
      %p64 = scmp.eq.s32.totalorder %s63, 0
      %s66 = sadd.s32 %s65, 1
      %s67 = scalar_select %p64, %s65, %s66
      %p70 = pneg %p64
      %p71 = scmp.eq.s32.totalorder %s8, 1
      %p72 = por %p70, %p71
      %p73 = scmp.ne.s32.totalorder %s65, %s68
      %p74 = scmp.eq.s32.totalorder %s8, 0
      %p75 = por %p73, %p74
      %p76 = scmp.ne.s32.totalorder %s65, %s68
      %p77 = scmp.eq.s32.totalorder %s13, 1
      %p78 = por %p76, %p77
      %p79 = scmp.ne.s32.totalorder %s68, %s69
      %p80 = scmp.eq.s32.totalorder %s13, 0
      %p81 = por %p79, %p80
      %p82 = scmp.ne.s32.totalorder %s68, %s69
      %p83 = scmp.eq.s32.totalorder %s14, 1
      %p84 = por %p82, %p83
      %p86 = scmp.ne.s32.totalorder %s69, %s85
      %p87 = scmp.eq.s32.totalorder %s14, 0
      %p88 = por %p86, %p87
      %p89 = scmp.le.s32.totalorder 1, %s8
      %p90 = scmp.lt.s32.totalorder %s8, 3
      %p91 = pnand %p89, %p90
      %p92 = pneg %p91
      // Predicated region
      $region9: #{tpu_custom_call.1} parent=5 // pred_check
        _
      $region10: #{tpu_custom_call.1} parent=5 // pred_check_branch
        %94 = sbr.rel (%p91) target = $region12
      $region11: #{tpu_custom_call.1} parent=5 // pred_region
        %s95 = ssub.s32 %s8, 1
        // Predicated region
        $region13: #{tpu_custom_call.1} parent=11 // pred_check
          %p96 = pneg %p55
        $region14: #{tpu_custom_call.1} parent=11 // pred_check_branch
          %98 = sbr.rel (%p96) target = $region16
        $region15: #{tpu_custom_call.1} parent=11 // pred_region
          _
        $region16: #{tpu_custom_call.1} parent=11 // pred_fallthru
          _
      $region12: #{tpu_custom_call.1} parent=5 // pred_fallthru
        _
      %p99 = scmp.lt.s32.totalorder %s8, 2
      // Predicated region
      $region17: #{tpu_custom_call.1} parent=5 // pred_check
        %p100 = pneg %p99
      $region18: #{tpu_custom_call.1} parent=5 // pred_check_branch
        %102 = sbr.rel (%p100) target = $region20
      $region19: #{tpu_custom_call.1} parent=5 // pred_region
        // Predicated region
        $region21: #{tpu_custom_call.1} parent=19 // pred_check
          %p103 = pneg %p28
        $region22: #{tpu_custom_call.1} parent=19 // pred_check_branch
          %105 = sbr.rel (%p103) target = $region24
        $region23: #{tpu_custom_call.1} parent=19 // pred_region
          %s106 = smul.u32 64, %s8
          %s107 = ssub.s32 81, %s106
          %p108 = scmp.lt.s32.totalorder %s107, 64
          %s109 = scalar_select %p108, %s107, 64
          %s110 = smul.u32 128, %s109
          %p111 = scmp.lt.s32.totalorder %s106, 80
          %s112 = scalar_select %p111, %s106, 80
          %s113 = smul.addr %s112, 8
          %s114 = scalar_lea.vmem %s0, %s113
          %s115 = smul.u32 64, %s8
          %s116 = ssub.s32 81, %s115
          %p117 = scmp.lt.s32.totalorder %s116, 64
          %s118 = scalar_select %p117, %s116, 64
          %s119 = smul.u32 128, %s118
        $region24: #{tpu_custom_call.1} parent=19 // pred_fallthru
          _
      $region20: #{tpu_custom_call.1} parent=5 // pred_fallthru
        _
      %p120 = scmp.le.s32.totalorder 1, %s8
      %p121 = scmp.lt.s32.totalorder %s8, 3
      %p122 = pnand %p120, %p121
      %p123 = pneg %p122
      // Predicated region
      $region25: #{tpu_custom_call.1} parent=5 // pred_check
        _
      $region26: #{tpu_custom_call.1} parent=5 // pred_check_branch
        %125 = sbr.rel (%p122) target = $region28
      $region27: #{tpu_custom_call.1} parent=5 // pred_region
        %s126 = ssub.s32 %s8, 1
        %s127 = smul.u32 64, %s13
        %s128 = ssub.s32 81, %s127
        %p129 = scmp.lt.s32.totalorder %s128, 64
        %s130 = scalar_select %p129, %s128, 64
        %s131 = smul.u32 128, %s130
        %p132 = scmp.lt.s32.totalorder %s127, 80
        %s133 = scalar_select %p132, %s127, 80
        %s134 = smul.addr %s133, 8
        %s135 = scalar_lea.vmem %s0, %s134
        %p136 = pneg %p34
        %p137 = pneg %p31
        %p138 = pneg %p55
        %p139 = pneg %p52
        %p140 = pneg %p81
        %p141 = pneg %p78
        %s142 = sand.u32 %s68, 1
        %s143 = sand.u32 %s68, 1
        %s144 = smul.addr %s143, 512
        %s145 = scalar_lea.vmem [#allocation2], %s144
        %s146 = smul.u32 64, %s13
        %s147 = ssub.s32 81, %s146
        %p148 = scmp.lt.s32.totalorder %s147, 64
        %s149 = scalar_select %p148, %s147, 64
        %s150 = smul.u32 128, %s149
        %p151 = scmp.lt.s32.totalorder %s146, 80
        %s152 = scalar_select %p151, %s146, 80
        %s153 = smul.addr %s152, 8
        %s154 = scalar_lea.vmem %s0, %s153
        %s155 = smul.u32 64, %s13
        %s156 = ssub.s32 81, %s155
        %p157 = scmp.lt.s32.totalorder %s156, 64
        %s158 = scalar_select %p157, %s156, 64
        %s159 = smul.u32 128, %s158
        %s160 = smul.u32 64, %s13
        %s161 = ssub.s32 81, %s160
        %p162 = scmp.lt.s32.totalorder %s161, 64
        %s163 = scalar_select %p162, %s161, 64
        %s164 = smul.u32 128, %s163
        %v165 = vld [vmem:[%s154] sm:$0xff]
        %v166 = vld [vmem:[%s154 + $0x8] sm:$0xff]
        %v167 = vld [vmem:[%s154 + $0x10] sm:$0xff]
        %v168 = vld [vmem:[%s154 + $0x18] sm:$0xff]
        %v169 = vld [vmem:[%s154 + $0x20] sm:$0xff]
        %v170 = vld [vmem:[%s154 + $0x28] sm:$0xff]
        %v171 = vld [vmem:[%s154 + $0x30] sm:$0xff]
        %v172 = vld [vmem:[%s154 + $0x38] sm:$0xff]
        %v173 = vld [vmem:[%s154 + $0x40] sm:$0xff]
        %v174 = vld [vmem:[%s154 + $0x48] sm:$0xff]
        %v175 = vld [vmem:[%s154 + $0x50] sm:$0xff]
        %v176 = vld [vmem:[%s154 + $0x58] sm:$0xff]
        %v177 = vld [vmem:[%s154 + $0x60] sm:$0xff]
        %v178 = vld [vmem:[%s154 + $0x68] sm:$0xff]
        %v179 = vld [vmem:[%s154 + $0x70] sm:$0xff]
        %v180 = vld [vmem:[%s154 + $0x78] sm:$0xff]
        %v181 = vld [vmem:[%s154 + $0x80] sm:$0xff]
        %v182 = vld [vmem:[%s154 + $0x88] sm:$0xff]
        %v183 = vld [vmem:[%s154 + $0x90] sm:$0xff]
        %v184 = vld [vmem:[%s154 + $0x98] sm:$0xff]
        %v185 = vld [vmem:[%s154 + $0xa0] sm:$0xff]
        %v186 = vld [vmem:[%s154 + $0xa8] sm:$0xff]
        %v187 = vld [vmem:[%s154 + $0xb0] sm:$0xff]
        %v188 = vld [vmem:[%s154 + $0xb8] sm:$0xff]
        %v189 = vld [vmem:[%s154 + $0xc0] sm:$0xff]
        %v190 = vld [vmem:[%s154 + $0xc8] sm:$0xff]
        %v191 = vld [vmem:[%s154 + $0xd0] sm:$0xff]
        %v192 = vld [vmem:[%s154 + $0xd8] sm:$0xff]
        %v193 = vld [vmem:[%s154 + $0xe0] sm:$0xff]
        %v194 = vld [vmem:[%s154 + $0xe8] sm:$0xff]
        %v195 = vld [vmem:[%s154 + $0xf0] sm:$0xff]
        %v196 = vld [vmem:[%s154 + $0xf8] sm:$0xff]
        %v197 = vld [vmem:[%s154 + $0x100] sm:$0xff]
        %v198 = vld [vmem:[%s154 + $0x108] sm:$0xff]
        %v199 = vld [vmem:[%s154 + $0x110] sm:$0xff]
        %v200 = vld [vmem:[%s154 + $0x118] sm:$0xff]
        %v201 = vld [vmem:[%s154 + $0x120] sm:$0xff]
        %v202 = vld [vmem:[%s154 + $0x128] sm:$0xff]
        %v203 = vld [vmem:[%s154 + $0x130] sm:$0xff]
        %v204 = vld [vmem:[%s154 + $0x138] sm:$0xff]
        %v205 = vld [vmem:[%s154 + $0x140] sm:$0xff]
        %v206 = vld [vmem:[%s154 + $0x148] sm:$0xff]
        %v207 = vld [vmem:[%s154 + $0x150] sm:$0xff]
        %v208 = vld [vmem:[%s154 + $0x158] sm:$0xff]
        %v209 = vld [vmem:[%s154 + $0x160] sm:$0xff]
        %v210 = vld [vmem:[%s154 + $0x168] sm:$0xff]
        %v211 = vld [vmem:[%s154 + $0x170] sm:$0xff]
        %v212 = vld [vmem:[%s154 + $0x178] sm:$0xff]
        %v213 = vld [vmem:[%s154 + $0x180] sm:$0xff]
        %v214 = vld [vmem:[%s154 + $0x188] sm:$0xff]
        %v215 = vld [vmem:[%s154 + $0x190] sm:$0xff]
        %v216 = vld [vmem:[%s154 + $0x198] sm:$0xff]
        %v217 = vld [vmem:[%s154 + $0x1a0] sm:$0xff]
        %v218 = vld [vmem:[%s154 + $0x1a8] sm:$0xff]
        %v219 = vld [vmem:[%s154 + $0x1b0] sm:$0xff]
        %v220 = vld [vmem:[%s154 + $0x1b8] sm:$0xff]
        %v221 = vld [vmem:[%s154 + $0x1c0] sm:$0xff]
        %v222 = vld [vmem:[%s154 + $0x1c8] sm:$0xff]
        %v223 = vld [vmem:[%s154 + $0x1d0] sm:$0xff]
        %v224 = vld [vmem:[%s154 + $0x1d8] sm:$0xff]
        %v225 = vld [vmem:[%s154 + $0x1e0] sm:$0xff]
        %v226 = vld [vmem:[%s154 + $0x1e8] sm:$0xff]
        %v227 = vld [vmem:[%s154 + $0x1f0] sm:$0xff]
        %v228 = vld [vmem:[%s154 + $0x1f8] sm:$0xff]
        %v229 = vld [vmem:[%s1] sm:$0xf]
        %vm230 = vcmask 31744
        %v232 = vsel %vm230, %v165, 0
        %v235 = vsel %vm230, %v166, 0
        %v238 = vsel %vm230, %v167, 0
        %v241 = vsel %vm230, %v168, 0
        %v244 = vsel %vm230, %v169, 0
        %v247 = vsel %vm230, %v170, 0
        %v250 = vsel %vm230, %v171, 0
        %v253 = vsel %vm230, %v172, 0
        %v256 = vsel %vm230, %v173, 0
        %v259 = vsel %vm230, %v174, 0
        %v262 = vsel %vm230, %v175, 0
        %v265 = vsel %vm230, %v176, 0
        %v268 = vsel %vm230, %v177, 0
        %v271 = vsel %vm230, %v178, 0
        %v274 = vsel %vm230, %v179, 0
        %v277 = vsel %vm230, %v180, 0
        %v280 = vsel %vm230, %v181, 0
        %v283 = vsel %vm230, %v182, 0
        %v286 = vsel %vm230, %v183, 0
        %v289 = vsel %vm230, %v184, 0
        %v292 = vsel %vm230, %v185, 0
        %v295 = vsel %vm230, %v186, 0
        %v298 = vsel %vm230, %v187, 0
        %v301 = vsel %vm230, %v188, 0
        %v304 = vsel %vm230, %v189, 0
        %v307 = vsel %vm230, %v190, 0
        %v310 = vsel %vm230, %v191, 0
        %v313 = vsel %vm230, %v192, 0
        %v316 = vsel %vm230, %v193, 0
        %v319 = vsel %vm230, %v194, 0
        %v322 = vsel %vm230, %v195, 0
        %v325 = vsel %vm230, %v196, 0
        %v328 = vsel %vm230, %v197, 0
        %v331 = vsel %vm230, %v198, 0
        %v334 = vsel %vm230, %v199, 0
        %v337 = vsel %vm230, %v200, 0
        %v340 = vsel %vm230, %v201, 0
        %v343 = vsel %vm230, %v202, 0
        %v346 = vsel %vm230, %v203, 0
        %v349 = vsel %vm230, %v204, 0
        %v352 = vsel %vm230, %v205, 0
        %v355 = vsel %vm230, %v206, 0
        %v358 = vsel %vm230, %v207, 0
        %v361 = vsel %vm230, %v208, 0
        %v364 = vsel %vm230, %v209, 0
        %v367 = vsel %vm230, %v210, 0
        %v370 = vsel %vm230, %v211, 0
        %v373 = vsel %vm230, %v212, 0
        %v376 = vsel %vm230, %v213, 0
        %v379 = vsel %vm230, %v214, 0
        %v382 = vsel %vm230, %v215, 0
        %v385 = vsel %vm230, %v216, 0
        %v388 = vsel %vm230, %v217, 0
        %v391 = vsel %vm230, %v218, 0
        %v394 = vsel %vm230, %v219, 0
        %v397 = vsel %vm230, %v220, 0
        %v400 = vsel %vm230, %v221, 0
        %v403 = vsel %vm230, %v222, 0
        %v406 = vsel %vm230, %v223, 0
        %v409 = vsel %vm230, %v224, 0
        %v412 = vsel %vm230, %v225, 0
        %v415 = vsel %vm230, %v226, 0
        %v418 = vsel %vm230, %v227, 0
        %v421 = vsel %vm230, %v228, 0
        %vm423 = vcmask 1043456
        %v425 = vsel %vm423, %v229, 0
        %427 = vmatprep.subr.mxu0 0.0
        %428 = vmatpush1.msra.mxu0 %v425
        %429 = vmatprep.subr.mxu0 0.0
        %430 = vmatpush1.msra.mxu0 0.0
        %431 = vmatprep.subr.mxu0 0.0
        %432 = vmatpush1.msra.mxu0 0.0
        %433 = vmatprep.subr.mxu0 0.0
        %434 = vmatpush1.msra.mxu0 0.0
        %435 = vmatprep.subr.mxu0 0.0
        %436 = vmatpush1.msra.mxu0 0.0
        %437 = vmatprep.subr.mxu0 0.0
        %438 = vmatpush1.msra.mxu0 0.0
        %439 = vmatprep.subr.mxu0 0.0
        %440 = vmatpush1.msra.mxu0 0.0
        %441 = vmatprep.subr.mxu0 0.0
        %442 = vmatpush1.msra.mxu0 0.0
        %443 = vmatprep.subr.mxu0 0.0
        %444 = vmatpush1.msra.mxu0 0.0
        %445 = vmatprep.subr.mxu0 0.0
        %446 = vmatpush1.msra.mxu0 0.0
        %447 = vmatprep.subr.mxu0 0.0
        %448 = vmatpush1.msra.mxu0 0.0
        %449 = vmatprep.subr.mxu0 0.0
        %450 = vmatpush1.msra.mxu0 0.0
        %451 = vmatprep.subr.mxu0 0.0
        %452 = vmatpush1.msra.mxu0 0.0
        %453 = vmatprep.subr.mxu0 0.0
        %454 = vmatpush1.msra.mxu0 0.0
        %455 = vmatprep.subr.mxu0 0.0
        %456 = vmatpush1.msra.mxu0 0.0
        %457 = vmatprep.subr.mxu0 0.0
        %458 = vmatpush1.msra.mxu0 0.0
        %459 = vmatprep.subr.mxu0 0.0
        %460 = vmatpush1.msra.mxu0 0.0
        %461 = vmatprep.subr.mxu0 0.0
        %462 = vmatpush1.msra.mxu0 0.0
        %463 = vmatprep.subr.mxu0 0.0
        %464 = vmatpush1.msra.mxu0 0.0
        %465 = vmatprep.subr.mxu0 0.0
        %466 = vmatpush1.msra.mxu0 0.0
        %467 = vmatprep.subr.mxu0 0.0
        %468 = vmatpush1.msra.mxu0 0.0
        %469 = vmatprep.subr.mxu0 0.0
        %470 = vmatpush1.msra.mxu0 0.0
        %471 = vmatprep.subr.mxu0 0.0
        %472 = vmatpush1.msra.mxu0 0.0
        %473 = vmatprep.subr.mxu0 0.0
        %474 = vmatpush1.msra.mxu0 0.0
        %475 = vmatprep.subr.mxu0 0.0
        %476 = vmatpush1.msra.mxu0 0.0
        %477 = vmatprep.subr.mxu0 0.0
        %478 = vmatpush1.msra.mxu0 0.0
        %479 = vmatprep.subr.mxu0 0.0
        %480 = vmatpush1.msra.mxu0 0.0
        %481 = vmatprep.subr.mxu0 0.0
        %482 = vmatpush1.msra.mxu0 0.0
        %483 = vmatprep.subr.mxu0 0.0
        %484 = vmatpush1.msra.mxu0 0.0
        %485 = vmatprep.subr.mxu0 0.0
        %486 = vmatpush1.msra.mxu0 0.0
        %487 = vmatprep.subr.mxu0 0.0
        %488 = vmatpush1.msra.mxu0 0.0
        %489 = vmatprep.subr.mxu0 0.0
        %490 = vmatpush1.msra.mxu0 0.0
        %491 = vmatprep.mubr.f32.mxu0 0.0
        %492 = vmatmul.mubr.f32.gmra.mrb[0].mxu0 %v232
        %v493 = vpop.f32.mrb[0].mxu0
        %v494 = vadd.f32 0.0, %v493
        %v495 = vpop.f32.mrb[0].mxu0
        %496 = vmatprep.mubr.f32.mxu0 0.0
        %497 = vmatmul.mubr.f32.gmra.mrb[0].mxu0 %v235
        %v498 = vpop.f32.mrb[0].mxu0
        %v499 = vadd.f32 0.0, %v498
        %v500 = vpop.f32.mrb[0].mxu0
        %501 = vmatprep.mubr.f32.mxu0 0.0
        %502 = vmatmul.mubr.f32.gmra.mrb[0].mxu0 %v238
        %v503 = vpop.f32.mrb[0].mxu0
        %v504 = vadd.f32 0.0, %v503
        %v505 = vpop.f32.mrb[0].mxu0
        %506 = vmatprep.mubr.f32.mxu0 0.0
        %507 = vmatmul.mubr.f32.gmra.mrb[0].mxu0 %v241
        %v508 = vpop.f32.mrb[0].mxu0
        %v509 = vadd.f32 0.0, %v508
        %v510 = vpop.f32.mrb[0].mxu0
        %511 = vmatprep.mubr.f32.mxu0 0.0
        %512 = vmatmul.mubr.f32.gmra.mrb[0].mxu0 %v244
        %v513 = vpop.f32.mrb[0].mxu0
        %v514 = vadd.f32 0.0, %v513
        %v515 = vpop.f32.mrb[0].mxu0
        %516 = vmatprep.mubr.f32.mxu0 0.0
        %517 = vmatmul.mubr.f32.gmra.mrb[0].mxu0 %v247
        %v518 = vpop.f32.mrb[0].mxu0
        %v519 = vadd.f32 0.0, %v518
        %v520 = vpop.f32.mrb[0].mxu0
        %521 = vmatprep.mubr.f32.mxu0 0.0
        %522 = vmatmul.mubr.f32.gmra.mrb[0].mxu0 %v250
        %v523 = vpop.f32.mrb[0].mxu0
        %v524 = vadd.f32 0.0, %v523
        %v525 = vpop.f32.mrb[0].mxu0
        %526 = vmatprep.mubr.f32.mxu0 0.0
        %527 = vmatmul.mubr.f32.gmra.mrb[0].mxu0 %v253
        %v528 = vpop.f32.mrb[0].mxu0
        %v529 = vadd.f32 0.0, %v528
        %v530 = vpop.f32.mrb[0].mxu0
        %531 = vmatprep.mubr.f32.mxu0 0.0
        %532 = vmatmul.mubr.f32.gmra.mrb[0].mxu0 %v256
        %v533 = vpop.f32.mrb[0].mxu0
        %v534 = vadd.f32 0.0, %v533
        %v535 = vpop.f32.mrb[0].mxu0
        %536 = vmatprep.mubr.f32.mxu0 0.0
        %537 = vmatmul.mubr.f32.gmra.mrb[0].mxu0 %v259
        %v538 = vpop.f32.mrb[0].mxu0
        %v539 = vadd.f32 0.0, %v538
        %v540 = vpop.f32.mrb[0].mxu0
        %541 = vmatprep.mubr.f32.mxu0 0.0
        %542 = vmatmul.mubr.f32.gmra.mrb[0].mxu0 %v262
        %v543 = vpop.f32.mrb[0].mxu0
        %v544 = vadd.f32 0.0, %v543
        %v545 = vpop.f32.mrb[0].mxu0
        %546 = vmatprep.mubr.f32.mxu0 0.0
        %547 = vmatmul.mubr.f32.gmra.mrb[0].mxu0 %v265
        %v548 = vpop.f32.mrb[0].mxu0
        %v549 = vadd.f32 0.0, %v548
        %v550 = vpop.f32.mrb[0].mxu0
        %551 = vmatprep.mubr.f32.mxu0 0.0
        %552 = vmatmul.mubr.f32.gmra.mrb[0].mxu0 %v268
        %v553 = vpop.f32.mrb[0].mxu0
        %v554 = vadd.f32 0.0, %v553
        %v555 = vpop.f32.mrb[0].mxu0
        %556 = vmatprep.mubr.f32.mxu0 0.0
        %557 = vmatmul.mubr.f32.gmra.mrb[0].mxu0 %v271
        %v558 = vpop.f32.mrb[0].mxu0
        %v559 = vadd.f32 0.0, %v558
        %v560 = vpop.f32.mrb[0].mxu0
        %561 = vmatprep.mubr.f32.mxu0 0.0
        %562 = vmatmul.mubr.f32.gmra.mrb[0].mxu0 %v274
        %v563 = vpop.f32.mrb[0].mxu0
        %v564 = vadd.f32 0.0, %v563
        %v565 = vpop.f32.mrb[0].mxu0
        %566 = vmatprep.mubr.f32.mxu0 0.0
        %567 = vmatmul.mubr.f32.gmra.mrb[0].mxu0 %v277
        %v568 = vpop.f32.mrb[0].mxu0
        %v569 = vadd.f32 0.0, %v568
        %v570 = vpop.f32.mrb[0].mxu0
        %571 = vmatprep.mubr.f32.mxu0 0.0
        %572 = vmatmul.mubr.f32.gmra.mrb[0].mxu0 %v280
        %v573 = vpop.f32.mrb[0].mxu0
        %v574 = vadd.f32 0.0, %v573
        %v575 = vpop.f32.mrb[0].mxu0
        %576 = vmatprep.mubr.f32.mxu0 0.0
        %577 = vmatmul.mubr.f32.gmra.mrb[0].mxu0 %v283
        %v578 = vpop.f32.mrb[0].mxu0
        %v579 = vadd.f32 0.0, %v578
        %v580 = vpop.f32.mrb[0].mxu0
        %581 = vmatprep.mubr.f32.mxu0 0.0
        %582 = vmatmul.mubr.f32.gmra.mrb[0].mxu0 %v286
        %v583 = vpop.f32.mrb[0].mxu0
        %v584 = vadd.f32 0.0, %v583
        %v585 = vpop.f32.mrb[0].mxu0
        %586 = vmatprep.mubr.f32.mxu0 0.0
        %587 = vmatmul.mubr.f32.gmra.mrb[0].mxu0 %v289
        %v588 = vpop.f32.mrb[0].mxu0
        %v589 = vadd.f32 0.0, %v588
        %v590 = vpop.f32.mrb[0].mxu0
        %591 = vmatprep.mubr.f32.mxu0 0.0
        %592 = vmatmul.mubr.f32.gmra.mrb[0].mxu0 %v292
        %v593 = vpop.f32.mrb[0].mxu0
        %v594 = vadd.f32 0.0, %v593
        %v595 = vpop.f32.mrb[0].mxu0
        %596 = vmatprep.mubr.f32.mxu0 0.0
        %597 = vmatmul.mubr.f32.gmra.mrb[0].mxu0 %v295
        %v598 = vpop.f32.mrb[0].mxu0
        %v599 = vadd.f32 0.0, %v598
        %v600 = vpop.f32.mrb[0].mxu0
        %601 = vmatprep.mubr.f32.mxu0 0.0
        %602 = vmatmul.mubr.f32.gmra.mrb[0].mxu0 %v298
        %v603 = vpop.f32.mrb[0].mxu0
        %v604 = vadd.f32 0.0, %v603
        %v605 = vpop.f32.mrb[0].mxu0
        %606 = vmatprep.mubr.f32.mxu0 0.0
        %607 = vmatmul.mubr.f32.gmra.mrb[0].mxu0 %v301
        %v608 = vpop.f32.mrb[0].mxu0
        %v609 = vadd.f32 0.0, %v608
        %v610 = vpop.f32.mrb[0].mxu0
        %611 = vmatprep.mubr.f32.mxu0 0.0
        %612 = vmatmul.mubr.f32.gmra.mrb[0].mxu0 %v304
        %v613 = vpop.f32.mrb[0].mxu0
        %v614 = vadd.f32 0.0, %v613
        %v615 = vpop.f32.mrb[0].mxu0
        %616 = vmatprep.mubr.f32.mxu0 0.0
        %617 = vmatmul.mubr.f32.gmra.mrb[0].mxu0 %v307
        %v618 = vpop.f32.mrb[0].mxu0
        %v619 = vadd.f32 0.0, %v618
        %v620 = vpop.f32.mrb[0].mxu0
        %621 = vmatprep.mubr.f32.mxu0 0.0
        %622 = vmatmul.mubr.f32.gmra.mrb[0].mxu0 %v310
        %v623 = vpop.f32.mrb[0].mxu0
        %v624 = vadd.f32 0.0, %v623
        %v625 = vpop.f32.mrb[0].mxu0
        %626 = vmatprep.mubr.f32.mxu0 0.0
        %627 = vmatmul.mubr.f32.gmra.mrb[0].mxu0 %v313
        %v628 = vpop.f32.mrb[0].mxu0
        %v629 = vadd.f32 0.0, %v628
        %v630 = vpop.f32.mrb[0].mxu0
        %631 = vmatprep.mubr.f32.mxu0 0.0
        %632 = vmatmul.mubr.f32.gmra.mrb[0].mxu0 %v316
        %v633 = vpop.f32.mrb[0].mxu0
        %v634 = vadd.f32 0.0, %v633
        %v635 = vpop.f32.mrb[0].mxu0
        %636 = vmatprep.mubr.f32.mxu0 0.0
        %637 = vmatmul.mubr.f32.gmra.mrb[0].mxu0 %v319
        %v638 = vpop.f32.mrb[0].mxu0
        %v639 = vadd.f32 0.0, %v638
        %v640 = vpop.f32.mrb[0].mxu0
        %641 = vmatprep.mubr.f32.mxu0 0.0
        %642 = vmatmul.mubr.f32.gmra.mrb[0].mxu0 %v322
        %v643 = vpop.f32.mrb[0].mxu0
        %v644 = vadd.f32 0.0, %v643
        %v645 = vpop.f32.mrb[0].mxu0
        %646 = vmatprep.mubr.f32.mxu0 0.0
        %647 = vmatmul.mubr.f32.gmra.mrb[0].mxu0 %v325
        %v648 = vpop.f32.mrb[0].mxu0
        %v649 = vadd.f32 0.0, %v648
        %v650 = vpop.f32.mrb[0].mxu0
        %651 = vmatprep.mubr.f32.mxu0 0.0
        %652 = vmatmul.mubr.f32.gmra.mrb[0].mxu0 %v328
        %v653 = vpop.f32.mrb[0].mxu0
        %v654 = vadd.f32 0.0, %v653
        %v655 = vpop.f32.mrb[0].mxu0
        %656 = vmatprep.mubr.f32.mxu0 0.0
        %657 = vmatmul.mubr.f32.gmra.mrb[0].mxu0 %v331
        %v658 = vpop.f32.mrb[0].mxu0
        %v659 = vadd.f32 0.0, %v658
        %v660 = vpop.f32.mrb[0].mxu0
        %661 = vmatprep.mubr.f32.mxu0 0.0
        %662 = vmatmul.mubr.f32.gmra.mrb[0].mxu0 %v334
        %v663 = vpop.f32.mrb[0].mxu0
        %v664 = vadd.f32 0.0, %v663
        %v665 = vpop.f32.mrb[0].mxu0
        %666 = vmatprep.mubr.f32.mxu0 0.0
        %667 = vmatmul.mubr.f32.gmra.mrb[0].mxu0 %v337
        %v668 = vpop.f32.mrb[0].mxu0
        %v669 = vadd.f32 0.0, %v668
        %v670 = vpop.f32.mrb[0].mxu0
        %671 = vmatprep.mubr.f32.mxu0 0.0
        %672 = vmatmul.mubr.f32.gmra.mrb[0].mxu0 %v340
        %v673 = vpop.f32.mrb[0].mxu0
        %v674 = vadd.f32 0.0, %v673
        %v675 = vpop.f32.mrb[0].mxu0
        %676 = vmatprep.mubr.f32.mxu0 0.0
        %677 = vmatmul.mubr.f32.gmra.mrb[0].mxu0 %v343
        %v678 = vpop.f32.mrb[0].mxu0
        %v679 = vadd.f32 0.0, %v678
        %v680 = vpop.f32.mrb[0].mxu0
        %681 = vmatprep.mubr.f32.mxu0 0.0
        %682 = vmatmul.mubr.f32.gmra.mrb[0].mxu0 %v346
        %v683 = vpop.f32.mrb[0].mxu0
        %v684 = vadd.f32 0.0, %v683
        %v685 = vpop.f32.mrb[0].mxu0
        %686 = vmatprep.mubr.f32.mxu0 0.0
        %687 = vmatmul.mubr.f32.gmra.mrb[0].mxu0 %v349
        %v688 = vpop.f32.mrb[0].mxu0
        %v689 = vadd.f32 0.0, %v688
        %v690 = vpop.f32.mrb[0].mxu0
        %691 = vmatprep.mubr.f32.mxu0 0.0
        %692 = vmatmul.mubr.f32.gmra.mrb[0].mxu0 %v352
        %v693 = vpop.f32.mrb[0].mxu0
        %v694 = vadd.f32 0.0, %v693
        %v695 = vpop.f32.mrb[0].mxu0
        %696 = vmatprep.mubr.f32.mxu0 0.0
        %697 = vmatmul.mubr.f32.gmra.mrb[0].mxu0 %v355
        %v698 = vpop.f32.mrb[0].mxu0
        %v699 = vadd.f32 0.0, %v698
        %v700 = vpop.f32.mrb[0].mxu0
        %701 = vmatprep.mubr.f32.mxu0 0.0
        %702 = vmatmul.mubr.f32.gmra.mrb[0].mxu0 %v358
        %v703 = vpop.f32.mrb[0].mxu0
        %v704 = vadd.f32 0.0, %v703
        %v705 = vpop.f32.mrb[0].mxu0
        %706 = vmatprep.mubr.f32.mxu0 0.0
        %707 = vmatmul.mubr.f32.gmra.mrb[0].mxu0 %v361
        %v708 = vpop.f32.mrb[0].mxu0
        %v709 = vadd.f32 0.0, %v708
        %v710 = vpop.f32.mrb[0].mxu0
        %711 = vmatprep.mubr.f32.mxu0 0.0
        %712 = vmatmul.mubr.f32.gmra.mrb[0].mxu0 %v364
        %v713 = vpop.f32.mrb[0].mxu0
        %v714 = vadd.f32 0.0, %v713
        %v715 = vpop.f32.mrb[0].mxu0
        %716 = vmatprep.mubr.f32.mxu0 0.0
        %717 = vmatmul.mubr.f32.gmra.mrb[0].mxu0 %v367
        %v718 = vpop.f32.mrb[0].mxu0
        %v719 = vadd.f32 0.0, %v718
        %v720 = vpop.f32.mrb[0].mxu0
        %721 = vmatprep.mubr.f32.mxu0 0.0
        %722 = vmatmul.mubr.f32.gmra.mrb[0].mxu0 %v370
        %v723 = vpop.f32.mrb[0].mxu0
        %v724 = vadd.f32 0.0, %v723
        %v725 = vpop.f32.mrb[0].mxu0
        %726 = vmatprep.mubr.f32.mxu0 0.0
        %727 = vmatmul.mubr.f32.gmra.mrb[0].mxu0 %v373
        %v728 = vpop.f32.mrb[0].mxu0
        %v729 = vadd.f32 0.0, %v728
        %v730 = vpop.f32.mrb[0].mxu0
        %731 = vmatprep.mubr.f32.mxu0 0.0
        %732 = vmatmul.mubr.f32.gmra.mrb[0].mxu0 %v376
        %v733 = vpop.f32.mrb[0].mxu0
        %v734 = vadd.f32 0.0, %v733
        %v735 = vpop.f32.mrb[0].mxu0
        %736 = vmatprep.mubr.f32.mxu0 0.0
        %737 = vmatmul.mubr.f32.gmra.mrb[0].mxu0 %v379
        %v738 = vpop.f32.mrb[0].mxu0
        %v739 = vadd.f32 0.0, %v738
        %v740 = vpop.f32.mrb[0].mxu0
        %741 = vmatprep.mubr.f32.mxu0 0.0
        %742 = vmatmul.mubr.f32.gmra.mrb[0].mxu0 %v382
        %v743 = vpop.f32.mrb[0].mxu0
        %v744 = vadd.f32 0.0, %v743
        %v745 = vpop.f32.mrb[0].mxu0
        %746 = vmatprep.mubr.f32.mxu0 0.0
        %747 = vmatmul.mubr.f32.gmra.mrb[0].mxu0 %v385
        %v748 = vpop.f32.mrb[0].mxu0
        %v749 = vadd.f32 0.0, %v748
        %v750 = vpop.f32.mrb[0].mxu0
        %751 = vmatprep.mubr.f32.mxu0 0.0
        %752 = vmatmul.mubr.f32.gmra.mrb[0].mxu0 %v388
        %v753 = vpop.f32.mrb[0].mxu0
        %v754 = vadd.f32 0.0, %v753
        %v755 = vpop.f32.mrb[0].mxu0
        %756 = vmatprep.mubr.f32.mxu0 0.0
        %757 = vmatmul.mubr.f32.gmra.mrb[0].mxu0 %v391
        %v758 = vpop.f32.mrb[0].mxu0
        %v759 = vadd.f32 0.0, %v758
        %v760 = vpop.f32.mrb[0].mxu0
        %761 = vmatprep.mubr.f32.mxu0 0.0
        %762 = vmatmul.mubr.f32.gmra.mrb[0].mxu0 %v394
        %v763 = vpop.f32.mrb[0].mxu0
        %v764 = vadd.f32 0.0, %v763
        %v765 = vpop.f32.mrb[0].mxu0
        %766 = vmatprep.mubr.f32.mxu0 0.0
        %767 = vmatmul.mubr.f32.gmra.mrb[0].mxu0 %v397
        %v768 = vpop.f32.mrb[0].mxu0
        %v769 = vadd.f32 0.0, %v768
        %v770 = vpop.f32.mrb[0].mxu0
        %771 = vmatprep.mubr.f32.mxu0 0.0
        %772 = vmatmul.mubr.f32.gmra.mrb[0].mxu0 %v400
        %v773 = vpop.f32.mrb[0].mxu0
        %v774 = vadd.f32 0.0, %v773
        %v775 = vpop.f32.mrb[0].mxu0
        %776 = vmatprep.mubr.f32.mxu0 0.0
        %777 = vmatmul.mubr.f32.gmra.mrb[0].mxu0 %v403
        %v778 = vpop.f32.mrb[0].mxu0
        %v779 = vadd.f32 0.0, %v778
        %v780 = vpop.f32.mrb[0].mxu0
        %781 = vmatprep.mubr.f32.mxu0 0.0
        %782 = vmatmul.mubr.f32.gmra.mrb[0].mxu0 %v406
        %v783 = vpop.f32.mrb[0].mxu0
        %v784 = vadd.f32 0.0, %v783
        %v785 = vpop.f32.mrb[0].mxu0
        %786 = vmatprep.mubr.f32.mxu0 0.0
        %787 = vmatmul.mubr.f32.gmra.mrb[0].mxu0 %v409
        %v788 = vpop.f32.mrb[0].mxu0
        %v789 = vadd.f32 0.0, %v788
        %v790 = vpop.f32.mrb[0].mxu0
        %791 = vmatprep.mubr.f32.mxu0 0.0
        %792 = vmatmul.mubr.f32.gmra.mrb[0].mxu0 %v412
        %v793 = vpop.f32.mrb[0].mxu0
        %v794 = vadd.f32 0.0, %v793
        %v795 = vpop.f32.mrb[0].mxu0
        %796 = vmatprep.mubr.f32.mxu0 0.0
        %797 = vmatmul.mubr.f32.gmra.mrb[0].mxu0 %v415
        %v798 = vpop.f32.mrb[0].mxu0
        %v799 = vadd.f32 0.0, %v798
        %v800 = vpop.f32.mrb[0].mxu0
        %801 = vmatprep.mubr.f32.mxu0 0.0
        %802 = vmatmul.mubr.f32.gmra.mrb[0].mxu0 %v418
        %v803 = vpop.f32.mrb[0].mxu0
        %v804 = vadd.f32 0.0, %v803
        %v805 = vpop.f32.mrb[0].mxu0
        %806 = vmatprep.mubr.f32.mxu0 0.0
        %807 = vmatmul.mubr.f32.gmra.mrb[0].mxu0 %v421
        %v808 = vpop.f32.mrb[0].mxu0
        %v809 = vadd.f32 0.0, %v808
        %v810 = vpop.f32.mrb[0].mxu0
        %811 = vdwg.mxu0
        %vm812 = vcmask 785408
        %813 = vst.msk [vmem:[%s145] sm:$0xff] %vm812, %v494
        %814 = vst.msk [vmem:[%s145 + $0x8] sm:$0xff] %vm812, %v499
        %815 = vst.msk [vmem:[%s145 + $0x10] sm:$0xff] %vm812, %v504
        %816 = vst.msk [vmem:[%s145 + $0x18] sm:$0xff] %vm812, %v509
        %817 = vst.msk [vmem:[%s145 + $0x20] sm:$0xff] %vm812, %v514
        %818 = vst.msk [vmem:[%s145 + $0x28] sm:$0xff] %vm812, %v519
        %819 = vst.msk [vmem:[%s145 + $0x30] sm:$0xff] %vm812, %v524
        %820 = vst.msk [vmem:[%s145 + $0x38] sm:$0xff] %vm812, %v529
        %821 = vst.msk [vmem:[%s145 + $0x40] sm:$0xff] %vm812, %v534
        %822 = vst.msk [vmem:[%s145 + $0x48] sm:$0xff] %vm812, %v539
        %823 = vst.msk [vmem:[%s145 + $0x50] sm:$0xff] %vm812, %v544
        %824 = vst.msk [vmem:[%s145 + $0x58] sm:$0xff] %vm812, %v549
        %825 = vst.msk [vmem:[%s145 + $0x60] sm:$0xff] %vm812, %v554
        %826 = vst.msk [vmem:[%s145 + $0x68] sm:$0xff] %vm812, %v559
        %827 = vst.msk [vmem:[%s145 + $0x70] sm:$0xff] %vm812, %v564
        %828 = vst.msk [vmem:[%s145 + $0x78] sm:$0xff] %vm812, %v569
        %829 = vst.msk [vmem:[%s145 + $0x80] sm:$0xff] %vm812, %v574
        %830 = vst.msk [vmem:[%s145 + $0x88] sm:$0xff] %vm812, %v579
        %831 = vst.msk [vmem:[%s145 + $0x90] sm:$0xff] %vm812, %v584
        %832 = vst.msk [vmem:[%s145 + $0x98] sm:$0xff] %vm812, %v589
        %833 = vst.msk [vmem:[%s145 + $0xa0] sm:$0xff] %vm812, %v594
        %834 = vst.msk [vmem:[%s145 + $0xa8] sm:$0xff] %vm812, %v599
        %835 = vst.msk [vmem:[%s145 + $0xb0] sm:$0xff] %vm812, %v604
        %836 = vst.msk [vmem:[%s145 + $0xb8] sm:$0xff] %vm812, %v609
        %837 = vst.msk [vmem:[%s145 + $0xc0] sm:$0xff] %vm812, %v614
        %838 = vst.msk [vmem:[%s145 + $0xc8] sm:$0xff] %vm812, %v619
        %839 = vst.msk [vmem:[%s145 + $0xd0] sm:$0xff] %vm812, %v624
        %840 = vst.msk [vmem:[%s145 + $0xd8] sm:$0xff] %vm812, %v629
        %841 = vst.msk [vmem:[%s145 + $0xe0] sm:$0xff] %vm812, %v634
        %842 = vst.msk [vmem:[%s145 + $0xe8] sm:$0xff] %vm812, %v639
        %843 = vst.msk [vmem:[%s145 + $0xf0] sm:$0xff] %vm812, %v644
        %844 = vst.msk [vmem:[%s145 + $0xf8] sm:$0xff] %vm812, %v649
        %845 = vst.msk [vmem:[%s145 + $0x100] sm:$0xff] %vm812, %v654
        %846 = vst.msk [vmem:[%s145 + $0x108] sm:$0xff] %vm812, %v659
        %847 = vst.msk [vmem:[%s145 + $0x110] sm:$0xff] %vm812, %v664
        %848 = vst.msk [vmem:[%s145 + $0x118] sm:$0xff] %vm812, %v669
        %849 = vst.msk [vmem:[%s145 + $0x120] sm:$0xff] %vm812, %v674
        %850 = vst.msk [vmem:[%s145 + $0x128] sm:$0xff] %vm812, %v679
        %851 = vst.msk [vmem:[%s145 + $0x130] sm:$0xff] %vm812, %v684
        %852 = vst.msk [vmem:[%s145 + $0x138] sm:$0xff] %vm812, %v689
        %853 = vst.msk [vmem:[%s145 + $0x140] sm:$0xff] %vm812, %v694
        %854 = vst.msk [vmem:[%s145 + $0x148] sm:$0xff] %vm812, %v699
        %855 = vst.msk [vmem:[%s145 + $0x150] sm:$0xff] %vm812, %v704
        %856 = vst.msk [vmem:[%s145 + $0x158] sm:$0xff] %vm812, %v709
        %857 = vst.msk [vmem:[%s145 + $0x160] sm:$0xff] %vm812, %v714
        %858 = vst.msk [vmem:[%s145 + $0x168] sm:$0xff] %vm812, %v719
        %859 = vst.msk [vmem:[%s145 + $0x170] sm:$0xff] %vm812, %v724
        %860 = vst.msk [vmem:[%s145 + $0x178] sm:$0xff] %vm812, %v729
        %861 = vst.msk [vmem:[%s145 + $0x180] sm:$0xff] %vm812, %v734
        %862 = vst.msk [vmem:[%s145 + $0x188] sm:$0xff] %vm812, %v739
        %863 = vst.msk [vmem:[%s145 + $0x190] sm:$0xff] %vm812, %v744
        %864 = vst.msk [vmem:[%s145 + $0x198] sm:$0xff] %vm812, %v749
        %865 = vst.msk [vmem:[%s145 + $0x1a0] sm:$0xff] %vm812, %v754
        %866 = vst.msk [vmem:[%s145 + $0x1a8] sm:$0xff] %vm812, %v759
        %867 = vst.msk [vmem:[%s145 + $0x1b0] sm:$0xff] %vm812, %v764
        %868 = vst.msk [vmem:[%s145 + $0x1b8] sm:$0xff] %vm812, %v769
        %869 = vst.msk [vmem:[%s145 + $0x1c0] sm:$0xff] %vm812, %v774
        %870 = vst.msk [vmem:[%s145 + $0x1c8] sm:$0xff] %vm812, %v779
        %871 = vst.msk [vmem:[%s145 + $0x1d0] sm:$0xff] %vm812, %v784
        %872 = vst.msk [vmem:[%s145 + $0x1d8] sm:$0xff] %vm812, %v789
        %873 = vst.msk [vmem:[%s145 + $0x1e0] sm:$0xff] %vm812, %v794
        %874 = vst.msk [vmem:[%s145 + $0x1e8] sm:$0xff] %vm812, %v799
        %875 = vst.msk [vmem:[%s145 + $0x1f0] sm:$0xff] %vm812, %v804
        %876 = vst.msk [vmem:[%s145 + $0x1f8] sm:$0xff] %vm812, %v809
        %s877 = sand.u32 %s68, 1
        %s878 = sand.u32 %s68, 1
        %s879 = smul.addr %s878, 512
        %s880 = scalar_lea.vmem [#allocation2], %s879
        // Predicated region
        $region29: #{tpu_custom_call.1} parent=27 // pred_check
          %p881 = pneg %p78
        $region30: #{tpu_custom_call.1} parent=27 // pred_check_branch
          %883 = sbr.rel (%p881) target = $region32
        $region31: #{tpu_custom_call.1} parent=27 // pred_region
          %s884 = smul.u32 64, %s13
          %s885 = ssub.s32 81, %s884
          %p886 = scmp.lt.s32.totalorder %s885, 64
          %s887 = scalar_select %p886, %s885, 64
          %s888 = smul.u32 128, %s887
          %p889 = scmp.ne.s32.totalorder 0, %s888
          %s890 = smul.addr %s884, 8
          %s891 = scalar_lea.vmem %s2, %s890
          // Predicated region
          $region33: #{tpu_custom_call.1} parent=31 // pred_check
            %p892 = pneg %p889
          $region34: #{tpu_custom_call.1} parent=31 // pred_check_branch
            %894 = sbr.rel (%p892) target = $region36
          $region35: #{tpu_custom_call.1} parent=31 // pred_region
            // Predicated region
            $region37: #{tpu_custom_call.1} parent=35 // pred_check
              _
            $region38: #{tpu_custom_call.1} parent=35 // pred_check_branch
              %896 = sbr.rel (0) target = $region40
            $region39: #{tpu_custom_call.1} parent=35 // pred_region
              // Predicated region
              $region59: #{tpu_custom_call.1} parent=39 // pred_check
                _
              $region60: #{tpu_custom_call.1} parent=39 // pred_check_branch
                %1071 = sbr.rel (0) target = $region62
              $region61: #{tpu_custom_call.1} parent=39 // pred_region
                %s1072 = sshrl.u32 %s887, 6
                // While loop
                $region63: #{tpu_custom_call.1} parent=61 // loop_pre_header
                  _
                $region64: #{tpu_custom_call.1} parent=61 // loop_header
                  %s1074 = sphi 0, %s1076
                  %p1075 = scmp.ge.s32.totalorder %s1074, %s1072
                  %s1079 = sphi 0, %s1212
                  %s1080 = sphi %s880, %s1215
                  %s1081 = sphi %s891, %s1216
                $region65: #{tpu_custom_call.1} parent=61 // loop_header_branch
                  %1078 = sbr.rel (%p1075) target = $region69
                $region66: #{tpu_custom_call.1} parent=61 // loop_body
                  %v1082 = vld [vmem:[%s1080] sm:$0xff]
                  %1083 = vst [vmem:[%s1081] sm:$0xff] %v1082
                  %v1084 = vld [vmem:[%s1080 + $0x8] sm:$0xff]
                  %1085 = vst [vmem:[%s1081 + $0x8] sm:$0xff] %v1084
                  %v1086 = vld [vmem:[%s1080 + $0x10] sm:$0xff]
                  %1087 = vst [vmem:[%s1081 + $0x10] sm:$0xff] %v1086
                  %v1088 = vld [vmem:[%s1080 + $0x18] sm:$0xff]
                  %1089 = vst [vmem:[%s1081 + $0x18] sm:$0xff] %v1088
                  %v1090 = vld [vmem:[%s1080 + $0x20] sm:$0xff]
                  %1091 = vst [vmem:[%s1081 + $0x20] sm:$0xff] %v1090
                  %v1092 = vld [vmem:[%s1080 + $0x28] sm:$0xff]
                  %1093 = vst [vmem:[%s1081 + $0x28] sm:$0xff] %v1092
                  %v1094 = vld [vmem:[%s1080 + $0x30] sm:$0xff]
                  %1095 = vst [vmem:[%s1081 + $0x30] sm:$0xff] %v1094
                  %v1096 = vld [vmem:[%s1080 + $0x38] sm:$0xff]
                  %1097 = vst [vmem:[%s1081 + $0x38] sm:$0xff] %v1096
                  %v1098 = vld [vmem:[%s1080 + $0x40] sm:$0xff]
                  %1099 = vst [vmem:[%s1081 + $0x40] sm:$0xff] %v1098
                  %v1100 = vld [vmem:[%s1080 + $0x48] sm:$0xff]
                  %1101 = vst [vmem:[%s1081 + $0x48] sm:$0xff] %v1100
                  %v1102 = vld [vmem:[%s1080 + $0x50] sm:$0xff]
                  %1103 = vst [vmem:[%s1081 + $0x50] sm:$0xff] %v1102
                  %v1104 = vld [vmem:[%s1080 + $0x58] sm:$0xff]
                  %1105 = vst [vmem:[%s1081 + $0x58] sm:$0xff] %v1104
                  %v1106 = vld [vmem:[%s1080 + $0x60] sm:$0xff]
                  %1107 = vst [vmem:[%s1081 + $0x60] sm:$0xff] %v1106
                  %v1108 = vld [vmem:[%s1080 + $0x68] sm:$0xff]
                  %1109 = vst [vmem:[%s1081 + $0x68] sm:$0xff] %v1108
                  %v1110 = vld [vmem:[%s1080 + $0x70] sm:$0xff]
                  %1111 = vst [vmem:[%s1081 + $0x70] sm:$0xff] %v1110
                  %v1112 = vld [vmem:[%s1080 + $0x78] sm:$0xff]
                  %1113 = vst [vmem:[%s1081 + $0x78] sm:$0xff] %v1112
                  %v1114 = vld [vmem:[%s1080 + $0x80] sm:$0xff]
                  %1115 = vst [vmem:[%s1081 + $0x80] sm:$0xff] %v1114
                  %v1116 = vld [vmem:[%s1080 + $0x88] sm:$0xff]
                  %1117 = vst [vmem:[%s1081 + $0x88] sm:$0xff] %v1116
                  %v1118 = vld [vmem:[%s1080 + $0x90] sm:$0xff]
                  %1119 = vst [vmem:[%s1081 + $0x90] sm:$0xff] %v1118
                  %v1120 = vld [vmem:[%s1080 + $0x98] sm:$0xff]
                  %1121 = vst [vmem:[%s1081 + $0x98] sm:$0xff] %v1120
                  %v1122 = vld [vmem:[%s1080 + $0xa0] sm:$0xff]
                  %1123 = vst [vmem:[%s1081 + $0xa0] sm:$0xff] %v1122
                  %v1124 = vld [vmem:[%s1080 + $0xa8] sm:$0xff]
                  %1125 = vst [vmem:[%s1081 + $0xa8] sm:$0xff] %v1124
                  %v1126 = vld [vmem:[%s1080 + $0xb0] sm:$0xff]
                  %1127 = vst [vmem:[%s1081 + $0xb0] sm:$0xff] %v1126
                  %v1128 = vld [vmem:[%s1080 + $0xb8] sm:$0xff]
                  %1129 = vst [vmem:[%s1081 + $0xb8] sm:$0xff] %v1128
                  %v1130 = vld [vmem:[%s1080 + $0xc0] sm:$0xff]
                  %1131 = vst [vmem:[%s1081 + $0xc0] sm:$0xff] %v1130
                  %v1132 = vld [vmem:[%s1080 + $0xc8] sm:$0xff]
                  %1133 = vst [vmem:[%s1081 + $0xc8] sm:$0xff] %v1132
                  %v1134 = vld [vmem:[%s1080 + $0xd0] sm:$0xff]
                  %1135 = vst [vmem:[%s1081 + $0xd0] sm:$0xff] %v1134
                  %v1136 = vld [vmem:[%s1080 + $0xd8] sm:$0xff]
                  %1137 = vst [vmem:[%s1081 + $0xd8] sm:$0xff] %v1136
                  %v1138 = vld [vmem:[%s1080 + $0xe0] sm:$0xff]
                  %1139 = vst [vmem:[%s1081 + $0xe0] sm:$0xff] %v1138
                  %v1140 = vld [vmem:[%s1080 + $0xe8] sm:$0xff]
                  %1141 = vst [vmem:[%s1081 + $0xe8] sm:$0xff] %v1140
                  %v1142 = vld [vmem:[%s1080 + $0xf0] sm:$0xff]
                  %1143 = vst [vmem:[%s1081 + $0xf0] sm:$0xff] %v1142
                  %v1144 = vld [vmem:[%s1080 + $0xf8] sm:$0xff]
                  %1145 = vst [vmem:[%s1081 + $0xf8] sm:$0xff] %v1144
                  %v1146 = vld [vmem:[%s1080 + $0x100] sm:$0xff]
                  %1147 = vst [vmem:[%s1081 + $0x100] sm:$0xff] %v1146
                  %v1148 = vld [vmem:[%s1080 + $0x108] sm:$0xff]
                  %1149 = vst [vmem:[%s1081 + $0x108] sm:$0xff] %v1148
                  %v1150 = vld [vmem:[%s1080 + $0x110] sm:$0xff]
                  %1151 = vst [vmem:[%s1081 + $0x110] sm:$0xff] %v1150
                  %v1152 = vld [vmem:[%s1080 + $0x118] sm:$0xff]
                  %1153 = vst [vmem:[%s1081 + $0x118] sm:$0xff] %v1152
                  %v1154 = vld [vmem:[%s1080 + $0x120] sm:$0xff]
                  %1155 = vst [vmem:[%s1081 + $0x120] sm:$0xff] %v1154
                  %v1156 = vld [vmem:[%s1080 + $0x128] sm:$0xff]
                  %1157 = vst [vmem:[%s1081 + $0x128] sm:$0xff] %v1156
                  %v1158 = vld [vmem:[%s1080 + $0x130] sm:$0xff]
                  %1159 = vst [vmem:[%s1081 + $0x130] sm:$0xff] %v1158
                  %v1160 = vld [vmem:[%s1080 + $0x138] sm:$0xff]
                  %1161 = vst [vmem:[%s1081 + $0x138] sm:$0xff] %v1160
                  %v1162 = vld [vmem:[%s1080 + $0x140] sm:$0xff]
                  %1163 = vst [vmem:[%s1081 + $0x140] sm:$0xff] %v1162
                  %v1164 = vld [vmem:[%s1080 + $0x148] sm:$0xff]
                  %1165 = vst [vmem:[%s1081 + $0x148] sm:$0xff] %v1164
                  %v1166 = vld [vmem:[%s1080 + $0x150] sm:$0xff]
                  %1167 = vst [vmem:[%s1081 + $0x150] sm:$0xff] %v1166
                  %v1168 = vld [vmem:[%s1080 + $0x158] sm:$0xff]
                  %1169 = vst [vmem:[%s1081 + $0x158] sm:$0xff] %v1168
                  %v1170 = vld [vmem:[%s1080 + $0x160] sm:$0xff]
                  %1171 = vst [vmem:[%s1081 + $0x160] sm:$0xff] %v1170
                  %v1172 = vld [vmem:[%s1080 + $0x168] sm:$0xff]
                  %1173 = vst [vmem:[%s1081 + $0x168] sm:$0xff] %v1172
                  %v1174 = vld [vmem:[%s1080 + $0x170] sm:$0xff]
                  %1175 = vst [vmem:[%s1081 + $0x170] sm:$0xff] %v1174
                  %v1176 = vld [vmem:[%s1080 + $0x178] sm:$0xff]
                  %1177 = vst [vmem:[%s1081 + $0x178] sm:$0xff] %v1176
                  %v1178 = vld [vmem:[%s1080 + $0x180] sm:$0xff]
                  %1179 = vst [vmem:[%s1081 + $0x180] sm:$0xff] %v1178
                  %v1180 = vld [vmem:[%s1080 + $0x188] sm:$0xff]
                  %1181 = vst [vmem:[%s1081 + $0x188] sm:$0xff] %v1180
                  %v1182 = vld [vmem:[%s1080 + $0x190] sm:$0xff]
                  %1183 = vst [vmem:[%s1081 + $0x190] sm:$0xff] %v1182
                  %v1184 = vld [vmem:[%s1080 + $0x198] sm:$0xff]
                  %1185 = vst [vmem:[%s1081 + $0x198] sm:$0xff] %v1184
                  %v1186 = vld [vmem:[%s1080 + $0x1a0] sm:$0xff]
                  %1187 = vst [vmem:[%s1081 + $0x1a0] sm:$0xff] %v1186
                  %v1188 = vld [vmem:[%s1080 + $0x1a8] sm:$0xff]
                  %1189 = vst [vmem:[%s1081 + $0x1a8] sm:$0xff] %v1188
                  %v1190 = vld [vmem:[%s1080 + $0x1b0] sm:$0xff]
                  %1191 = vst [vmem:[%s1081 + $0x1b0] sm:$0xff] %v1190
                  %v1192 = vld [vmem:[%s1080 + $0x1b8] sm:$0xff]
                  %1193 = vst [vmem:[%s1081 + $0x1b8] sm:$0xff] %v1192
                  %v1194 = vld [vmem:[%s1080 + $0x1c0] sm:$0xff]
                  %1195 = vst [vmem:[%s1081 + $0x1c0] sm:$0xff] %v1194
                  %v1196 = vld [vmem:[%s1080 + $0x1c8] sm:$0xff]
                  %1197 = vst [vmem:[%s1081 + $0x1c8] sm:$0xff] %v1196
                  %v1198 = vld [vmem:[%s1080 + $0x1d0] sm:$0xff]
                  %1199 = vst [vmem:[%s1081 + $0x1d0] sm:$0xff] %v1198
                  %v1200 = vld [vmem:[%s1080 + $0x1d8] sm:$0xff]
                  %1201 = vst [vmem:[%s1081 + $0x1d8] sm:$0xff] %v1200
                  %v1202 = vld [vmem:[%s1080 + $0x1e0] sm:$0xff]
                  %1203 = vst [vmem:[%s1081 + $0x1e0] sm:$0xff] %v1202
                  %v1204 = vld [vmem:[%s1080 + $0x1e8] sm:$0xff]
                  %1205 = vst [vmem:[%s1081 + $0x1e8] sm:$0xff] %v1204
                  %v1206 = vld [vmem:[%s1080 + $0x1f0] sm:$0xff]
                  %1207 = vst [vmem:[%s1081 + $0x1f0] sm:$0xff] %v1206
                  %v1208 = vld [vmem:[%s1080 + $0x1f8] sm:$0xff]
                  %1209 = vst [vmem:[%s1081 + $0x1f8] sm:$0xff] %v1208
                  %s1210 = sadd.s32 1, %s1079
                  %p1211 = scmp.ge.s32.totalorder %s1210, %s1072
                  %s1212 = scalar_select %p1211, 0, %s1210
                  %s1213 = smul.u32 %s1212, 512
                  %s1214 = smul.u32 %s1212, 512
                  %s1215 = scalar_lea.vmem %s880, %s1213 [#allocation2]
                  %s1216 = scalar_lea.vmem %s891, %s1214
                $region67: #{tpu_custom_call.1} parent=61 // loop_footer
                  %s1076 = sadd.s32 %s1074, 1
                $region68: #{tpu_custom_call.1} parent=61 // loop_footer_branch
                  %1073 = sbr.rel target = $region64
                $region69: #{tpu_custom_call.1} parent=61 // loop_exit
                  _
                %s1217 = sshrl.u32 %s887, 6
                %s1218 = sand.u32 %s887, 63
                %s1219 = smul.u32 %s1217, 64
                %s1220 = smul.u32 8, %s1219
                %s1221 = scalar_lea.vmem %s880, %s1220 [#allocation2]
                %s1222 = smul.u32 8, %s1219
                %s1223 = scalar_lea.vmem %s891, %s1222
                // While loop
                $region70: #{tpu_custom_call.1} parent=61 // loop_pre_header
                  _
                $region71: #{tpu_custom_call.1} parent=61 // loop_header
                  %s1225 = sphi 0, %s1227
                  %p1226 = scmp.ge.s32.totalorder %s1225, %s1218
                  %s1230 = sphi 0, %s1237
                  %s1231 = sphi %s1221, %s1240
                  %s1232 = sphi %s1223, %s1241
                $region72: #{tpu_custom_call.1} parent=61 // loop_header_branch
                  %1229 = sbr.rel (%p1226) target = $region76
                $region73: #{tpu_custom_call.1} parent=61 // loop_body
                  %v1233 = vld [vmem:[%s1231] sm:$0xff]
                  %1234 = vst [vmem:[%s1232] sm:$0xff] %v1233
                  %s1235 = sadd.s32 1, %s1230
                  %p1236 = scmp.ge.s32.totalorder %s1235, %s1218
                  %s1237 = scalar_select %p1236, 0, %s1235
                  %s1238 = smul.u32 %s1237, 8
                  %s1239 = smul.u32 %s1237, 8
                  %s1240 = scalar_lea.vmem %s1221, %s1238 [#allocation2]
                  %s1241 = scalar_lea.vmem %s1223, %s1239
                $region74: #{tpu_custom_call.1} parent=61 // loop_footer
                  %s1227 = sadd.s32 %s1225, 1
                $region75: #{tpu_custom_call.1} parent=61 // loop_footer_branch
                  %1224 = sbr.rel target = $region71
                $region76: #{tpu_custom_call.1} parent=61 // loop_exit
                  _
              $region62: #{tpu_custom_call.1} parent=39 // pred_fallthru
                _
              // Predicated region
              $region77: #{tpu_custom_call.1} parent=39 // pred_check
                _
              $region78: #{tpu_custom_call.1} parent=39 // pred_check_branch
                %1243 = sbr.rel target = $region80
              $region79: #{tpu_custom_call.1} parent=39 // pred_region
                _
              $region80: #{tpu_custom_call.1} parent=39 // pred_fallthru
                _
            $region40: #{tpu_custom_call.1} parent=35 // pred_fallthru
              _
            // Predicated region
            $region41: #{tpu_custom_call.1} parent=35 // pred_check
              _
            $region42: #{tpu_custom_call.1} parent=35 // pred_check_branch
              %898 = sbr.rel target = $region44
            $region43: #{tpu_custom_call.1} parent=35 // pred_region
              %s900 = sshrl.u32 %s887, 6
              // While loop
              $region45: #{tpu_custom_call.1} parent=43 // loop_pre_header
                _
              $region46: #{tpu_custom_call.1} parent=43 // loop_header
                %s902 = sphi 0, %s904
                %p903 = scmp.ge.s32.totalorder %s902, %s900
                %s907 = sphi 0, %s1040
                %s908 = sphi %s880, %s1043
                %s909 = sphi %s891, %s1044
              $region47: #{tpu_custom_call.1} parent=43 // loop_header_branch
                %906 = sbr.rel (%p903) target = $region51
              $region48: #{tpu_custom_call.1} parent=43 // loop_body
                %v910 = vld [vmem:[%s908] sm:$0xff]
                %911 = vst [vmem:[%s909] sm:$0xff] %v910
                %v912 = vld [vmem:[%s908 + $0x8] sm:$0xff]
                %913 = vst [vmem:[%s909 + $0x8] sm:$0xff] %v912
                %v914 = vld [vmem:[%s908 + $0x10] sm:$0xff]
                %915 = vst [vmem:[%s909 + $0x10] sm:$0xff] %v914
                %v916 = vld [vmem:[%s908 + $0x18] sm:$0xff]
                %917 = vst [vmem:[%s909 + $0x18] sm:$0xff] %v916
                %v918 = vld [vmem:[%s908 + $0x20] sm:$0xff]
                %919 = vst [vmem:[%s909 + $0x20] sm:$0xff] %v918
                %v920 = vld [vmem:[%s908 + $0x28] sm:$0xff]
                %921 = vst [vmem:[%s909 + $0x28] sm:$0xff] %v920
                %v922 = vld [vmem:[%s908 + $0x30] sm:$0xff]
                %923 = vst [vmem:[%s909 + $0x30] sm:$0xff] %v922
                %v924 = vld [vmem:[%s908 + $0x38] sm:$0xff]
                %925 = vst [vmem:[%s909 + $0x38] sm:$0xff] %v924
                %v926 = vld [vmem:[%s908 + $0x40] sm:$0xff]
                %927 = vst [vmem:[%s909 + $0x40] sm:$0xff] %v926
                %v928 = vld [vmem:[%s908 + $0x48] sm:$0xff]
                %929 = vst [vmem:[%s909 + $0x48] sm:$0xff] %v928
                %v930 = vld [vmem:[%s908 + $0x50] sm:$0xff]
                %931 = vst [vmem:[%s909 + $0x50] sm:$0xff] %v930
                %v932 = vld [vmem:[%s908 + $0x58] sm:$0xff]
                %933 = vst [vmem:[%s909 + $0x58] sm:$0xff] %v932
                %v934 = vld [vmem:[%s908 + $0x60] sm:$0xff]
                %935 = vst [vmem:[%s909 + $0x60] sm:$0xff] %v934
                %v936 = vld [vmem:[%s908 + $0x68] sm:$0xff]
                %937 = vst [vmem:[%s909 + $0x68] sm:$0xff] %v936
                %v938 = vld [vmem:[%s908 + $0x70] sm:$0xff]
                %939 = vst [vmem:[%s909 + $0x70] sm:$0xff] %v938
                %v940 = vld [vmem:[%s908 + $0x78] sm:$0xff]
                %941 = vst [vmem:[%s909 + $0x78] sm:$0xff] %v940
                %v942 = vld [vmem:[%s908 + $0x80] sm:$0xff]
                %943 = vst [vmem:[%s909 + $0x80] sm:$0xff] %v942
                %v944 = vld [vmem:[%s908 + $0x88] sm:$0xff]
                %945 = vst [vmem:[%s909 + $0x88] sm:$0xff] %v944
                %v946 = vld [vmem:[%s908 + $0x90] sm:$0xff]
                %947 = vst [vmem:[%s909 + $0x90] sm:$0xff] %v946
                %v948 = vld [vmem:[%s908 + $0x98] sm:$0xff]
                %949 = vst [vmem:[%s909 + $0x98] sm:$0xff] %v948
                %v950 = vld [vmem:[%s908 + $0xa0] sm:$0xff]
                %951 = vst [vmem:[%s909 + $0xa0] sm:$0xff] %v950
                %v952 = vld [vmem:[%s908 + $0xa8] sm:$0xff]
                %953 = vst [vmem:[%s909 + $0xa8] sm:$0xff] %v952
                %v954 = vld [vmem:[%s908 + $0xb0] sm:$0xff]
                %955 = vst [vmem:[%s909 + $0xb0] sm:$0xff] %v954
                %v956 = vld [vmem:[%s908 + $0xb8] sm:$0xff]
                %957 = vst [vmem:[%s909 + $0xb8] sm:$0xff] %v956
                %v958 = vld [vmem:[%s908 + $0xc0] sm:$0xff]
                %959 = vst [vmem:[%s909 + $0xc0] sm:$0xff] %v958
                %v960 = vld [vmem:[%s908 + $0xc8] sm:$0xff]
                %961 = vst [vmem:[%s909 + $0xc8] sm:$0xff] %v960
                %v962 = vld [vmem:[%s908 + $0xd0] sm:$0xff]
                %963 = vst [vmem:[%s909 + $0xd0] sm:$0xff] %v962
                %v964 = vld [vmem:[%s908 + $0xd8] sm:$0xff]
                %965 = vst [vmem:[%s909 + $0xd8] sm:$0xff] %v964
                %v966 = vld [vmem:[%s908 + $0xe0] sm:$0xff]
                %967 = vst [vmem:[%s909 + $0xe0] sm:$0xff] %v966
                %v968 = vld [vmem:[%s908 + $0xe8] sm:$0xff]
                %969 = vst [vmem:[%s909 + $0xe8] sm:$0xff] %v968
                %v970 = vld [vmem:[%s908 + $0xf0] sm:$0xff]
                %971 = vst [vmem:[%s909 + $0xf0] sm:$0xff] %v970
                %v972 = vld [vmem:[%s908 + $0xf8] sm:$0xff]
                %973 = vst [vmem:[%s909 + $0xf8] sm:$0xff] %v972
                %v974 = vld [vmem:[%s908 + $0x100] sm:$0xff]
                %975 = vst [vmem:[%s909 + $0x100] sm:$0xff] %v974
                %v976 = vld [vmem:[%s908 + $0x108] sm:$0xff]
                %977 = vst [vmem:[%s909 + $0x108] sm:$0xff] %v976
                %v978 = vld [vmem:[%s908 + $0x110] sm:$0xff]
                %979 = vst [vmem:[%s909 + $0x110] sm:$0xff] %v978
                %v980 = vld [vmem:[%s908 + $0x118] sm:$0xff]
                %981 = vst [vmem:[%s909 + $0x118] sm:$0xff] %v980
                %v982 = vld [vmem:[%s908 + $0x120] sm:$0xff]
                %983 = vst [vmem:[%s909 + $0x120] sm:$0xff] %v982
                %v984 = vld [vmem:[%s908 + $0x128] sm:$0xff]
                %985 = vst [vmem:[%s909 + $0x128] sm:$0xff] %v984
                %v986 = vld [vmem:[%s908 + $0x130] sm:$0xff]
                %987 = vst [vmem:[%s909 + $0x130] sm:$0xff] %v986
                %v988 = vld [vmem:[%s908 + $0x138] sm:$0xff]
                %989 = vst [vmem:[%s909 + $0x138] sm:$0xff] %v988
                %v990 = vld [vmem:[%s908 + $0x140] sm:$0xff]
                %991 = vst [vmem:[%s909 + $0x140] sm:$0xff] %v990
                %v992 = vld [vmem:[%s908 + $0x148] sm:$0xff]
                %993 = vst [vmem:[%s909 + $0x148] sm:$0xff] %v992
                %v994 = vld [vmem:[%s908 + $0x150] sm:$0xff]
                %995 = vst [vmem:[%s909 + $0x150] sm:$0xff] %v994
                %v996 = vld [vmem:[%s908 + $0x158] sm:$0xff]
                %997 = vst [vmem:[%s909 + $0x158] sm:$0xff] %v996
                %v998 = vld [vmem:[%s908 + $0x160] sm:$0xff]
                %999 = vst [vmem:[%s909 + $0x160] sm:$0xff] %v998
                %v1000 = vld [vmem:[%s908 + $0x168] sm:$0xff]
                %1001 = vst [vmem:[%s909 + $0x168] sm:$0xff] %v1000
                %v1002 = vld [vmem:[%s908 + $0x170] sm:$0xff]
                %1003 = vst [vmem:[%s909 + $0x170] sm:$0xff] %v1002
                %v1004 = vld [vmem:[%s908 + $0x178] sm:$0xff]
                %1005 = vst [vmem:[%s909 + $0x178] sm:$0xff] %v1004
                %v1006 = vld [vmem:[%s908 + $0x180] sm:$0xff]
                %1007 = vst [vmem:[%s909 + $0x180] sm:$0xff] %v1006
                %v1008 = vld [vmem:[%s908 + $0x188] sm:$0xff]
                %1009 = vst [vmem:[%s909 + $0x188] sm:$0xff] %v1008
                %v1010 = vld [vmem:[%s908 + $0x190] sm:$0xff]
                %1011 = vst [vmem:[%s909 + $0x190] sm:$0xff] %v1010
                %v1012 = vld [vmem:[%s908 + $0x198] sm:$0xff]
                %1013 = vst [vmem:[%s909 + $0x198] sm:$0xff] %v1012
                %v1014 = vld [vmem:[%s908 + $0x1a0] sm:$0xff]
                %1015 = vst [vmem:[%s909 + $0x1a0] sm:$0xff] %v1014
                %v1016 = vld [vmem:[%s908 + $0x1a8] sm:$0xff]
                %1017 = vst [vmem:[%s909 + $0x1a8] sm:$0xff] %v1016
                %v1018 = vld [vmem:[%s908 + $0x1b0] sm:$0xff]
                %1019 = vst [vmem:[%s909 + $0x1b0] sm:$0xff] %v1018
                %v1020 = vld [vmem:[%s908 + $0x1b8] sm:$0xff]
                %1021 = vst [vmem:[%s909 + $0x1b8] sm:$0xff] %v1020
                %v1022 = vld [vmem:[%s908 + $0x1c0] sm:$0xff]
                %1023 = vst [vmem:[%s909 + $0x1c0] sm:$0xff] %v1022
                %v1024 = vld [vmem:[%s908 + $0x1c8] sm:$0xff]
                %1025 = vst [vmem:[%s909 + $0x1c8] sm:$0xff] %v1024
                %v1026 = vld [vmem:[%s908 + $0x1d0] sm:$0xff]
                %1027 = vst [vmem:[%s909 + $0x1d0] sm:$0xff] %v1026
                %v1028 = vld [vmem:[%s908 + $0x1d8] sm:$0xff]
                %1029 = vst [vmem:[%s909 + $0x1d8] sm:$0xff] %v1028
                %v1030 = vld [vmem:[%s908 + $0x1e0] sm:$0xff]
                %1031 = vst [vmem:[%s909 + $0x1e0] sm:$0xff] %v1030
                %v1032 = vld [vmem:[%s908 + $0x1e8] sm:$0xff]
                %1033 = vst [vmem:[%s909 + $0x1e8] sm:$0xff] %v1032
                %v1034 = vld [vmem:[%s908 + $0x1f0] sm:$0xff]
                %1035 = vst [vmem:[%s909 + $0x1f0] sm:$0xff] %v1034
                %v1036 = vld [vmem:[%s908 + $0x1f8] sm:$0xff]
                %1037 = vst [vmem:[%s909 + $0x1f8] sm:$0xff] %v1036
                %s1038 = sadd.s32 1, %s907
                %p1039 = scmp.ge.s32.totalorder %s1038, %s900
                %s1040 = scalar_select %p1039, 0, %s1038
                %s1041 = smul.u32 %s1040, 512
                %s1042 = smul.u32 %s1040, 512
                %s1043 = scalar_lea.vmem %s880, %s1041 [#allocation2]
                %s1044 = scalar_lea.vmem %s891, %s1042
              $region49: #{tpu_custom_call.1} parent=43 // loop_footer
                %s904 = sadd.s32 %s902, 1
              $region50: #{tpu_custom_call.1} parent=43 // loop_footer_branch
                %901 = sbr.rel target = $region46
              $region51: #{tpu_custom_call.1} parent=43 // loop_exit
                _
              %s1045 = sshrl.u32 %s887, 6
              %s1046 = sand.u32 %s887, 63
              %s1047 = smul.u32 %s1045, 64
              %s1048 = smul.u32 8, %s1047
              %s1049 = scalar_lea.vmem %s880, %s1048 [#allocation2]
              %s1050 = smul.u32 8, %s1047
              %s1051 = scalar_lea.vmem %s891, %s1050
              // While loop
              $region52: #{tpu_custom_call.1} parent=43 // loop_pre_header
                _
              $region53: #{tpu_custom_call.1} parent=43 // loop_header
                %s1053 = sphi 0, %s1055
                %p1054 = scmp.ge.s32.totalorder %s1053, %s1046
                %s1058 = sphi 0, %s1065
                %s1059 = sphi %s1049, %s1068
                %s1060 = sphi %s1051, %s1069
              $region54: #{tpu_custom_call.1} parent=43 // loop_header_branch
                %1057 = sbr.rel (%p1054) target = $region58
              $region55: #{tpu_custom_call.1} parent=43 // loop_body
                %v1061 = vld [vmem:[%s1059] sm:$0xff]
                %1062 = vst [vmem:[%s1060] sm:$0xff] %v1061
                %s1063 = sadd.s32 1, %s1058
                %p1064 = scmp.ge.s32.totalorder %s1063, %s1046
                %s1065 = scalar_select %p1064, 0, %s1063
                %s1066 = smul.u32 %s1065, 8
                %s1067 = smul.u32 %s1065, 8
                %s1068 = scalar_lea.vmem %s1049, %s1066 [#allocation2]
                %s1069 = scalar_lea.vmem %s1051, %s1067
              $region56: #{tpu_custom_call.1} parent=43 // loop_footer
                %s1055 = sadd.s32 %s1053, 1
              $region57: #{tpu_custom_call.1} parent=43 // loop_footer_branch
                %1052 = sbr.rel target = $region53
              $region58: #{tpu_custom_call.1} parent=43 // loop_exit
                _
            $region44: #{tpu_custom_call.1} parent=35 // pred_fallthru
              _
          $region36: #{tpu_custom_call.1} parent=31 // pred_fallthru
            _
          %1244 = vnop
        $region32: #{tpu_custom_call.1} parent=27 // pred_fallthru
          _
      $region28: #{tpu_custom_call.1} parent=5 // pred_fallthru
        _
      %p1245 = scmp.le.s32.totalorder 2, %s8
      // Predicated region
      $region81: #{tpu_custom_call.1} parent=5 // pred_check
        %p1246 = pneg %p1245
      $region82: #{tpu_custom_call.1} parent=5 // pred_check_branch
        %1248 = sbr.rel (%p1246) target = $region84
      $region83: #{tpu_custom_call.1} parent=5 // pred_region
        %s1249 = ssub.s32 %s8, 2
        // Predicated region
        $region85: #{tpu_custom_call.1} parent=83 // pred_check
          %p1250 = pneg %p84
        $region86: #{tpu_custom_call.1} parent=83 // pred_check_branch
          %1252 = sbr.rel (%p1250) target = $region88
        $region87: #{tpu_custom_call.1} parent=83 // pred_region
          %s1253 = sand.u32 %s69, 1
          %s1254 = sand.u32 %s69, 1
          %s1255 = smul.addr %s1254, 512
          %s1256 = scalar_lea.vmem [#allocation2], %s1255
        $region88: #{tpu_custom_call.1} parent=83 // pred_fallthru
          _
      $region84: #{tpu_custom_call.1} parent=5 // pred_fallthru
        _
    $region6: #{tpu_custom_call.1} parent=1 // loop_footer
      %s12 = sadd.s32 1, %s8
    $region7: #{tpu_custom_call.1} parent=1 // loop_footer_branch
      %7 = sbr.rel target = $region3
    $region8: #{tpu_custom_call.1} parent=1 // loop_exit
      _

</llo_original>
